<compile_context>
chip_gen: v7x
topology: tpu7x:2x2x1
jax: 0.10.0
libtpu: 0.0.40
codegen_flags: <defaults>
</compile_context>

<pallas_src>
import functools

import jax
import jax.numpy as jnp
import numpy as np
from jax.experimental import pallas as pl
from jax.experimental.pallas import tpu as pltpu

EPS = 1e-5  # nn.InstanceNorm2d default eps

_TAPS = tuple((dy, dx) for dy in (-1, 0, 1) for dx in (-1, 0, 1))


def _instance_norm_relu(a):
    """Single-pass InstanceNorm (biased var, no affine) + ReLU on (C, HW)."""
    inv_n = 1.0 / float(a.shape[1])
    mean = jnp.sum(a, axis=1, keepdims=True) * inv_n            # (C, 1)
    ex2 = jnp.sum(a * a, axis=1, keepdims=True) * inv_n         # E[x^2]
    var = ex2 - mean * mean                                     # biased variance
    a = (a - mean) * jax.lax.rsqrt(var + EPS)
    return jnp.maximum(a, 0.0)


def residual_block_kernel(x_ref, w1_ref, w2_ref, mask_ref, out_ref, *, H, W):
    """One sample per grid step.  x_ref: (1, C, HW); w*_ref: (C, 9*C+1);
    mask_ref: (9*C+1, HW) with the last (bias) row equal to 1."""
    HW = H * W
    x = x_ref[0]                                                # (C, HW)
    mask = mask_ref[...]                                        # (9*C+1, HW)
    ones_row = jnp.ones((1, HW), jnp.float32)                   # bias row
    # Tap shift = lane rotation by the flattened (dy, dx) offset; the host
    # mask zeroes every position where the tap falls outside the image, so
    # row-wrap artifacts of the flat roll never survive.
    shifts = [(-(dy * W + dx)) % HW for dy, dx in _TAPS]

    def norm_relu_conv(a, w_ref):
        a = _instance_norm_relu(a)
        # im2col rows: tap-major, channel-minor, plus a trailing 1.0 bias row.
        slabs = [a if s == 0 else pltpu.roll(a, s, axis=1) for s in shifts]
        im = jnp.concatenate(slabs + [ones_row], axis=0) * mask  # (9*C+1, HW)
        # One fat MXU contraction; bias folded into the last weight column.
        return jnp.dot(w_ref[...], im, preferred_element_type=jnp.float32)

    o = norm_relu_conv(x, w1_ref)                               # block1
    o = norm_relu_conv(o, w2_ref)                               # block2
    out_ref[0] = x + o                                          # residual add


def _pack_weight(w, b):
    """HWIO (3,3,Cin,Cout) + bias (Cout,) -> (Cout, 9*Cin+1) slab whose column
    order matches the im2col rows (tap-major, channel-minor, bias last)."""
    kh, kw, cin, cout = w.shape
    wt = jnp.transpose(w, (3, 0, 1, 2)).reshape(cout, kh * kw * cin)
    return jnp.concatenate([wt, b.reshape(cout, 1)], axis=1).astype(jnp.float32)


def _make_mask(C, H, W):
    """Host-precomputed (9*C+1, HW) f32 edge-validity mask, already broadcast
    to C rows per tap; the trailing bias row is all ones."""
    HW = H * W
    pos = np.arange(HW)
    yy, xx = pos // W, pos % W
    rows = []
    for dy, dx in _TAPS:
        m = ((yy + dy >= 0) & (yy + dy < H) &
             (xx + dx >= 0) & (xx + dx < W)).astype(np.float32)
        rows.append(np.broadcast_to(m[None, :], (C, HW)))
    rows.append(np.ones((1, HW), np.float32))
    return jnp.asarray(np.concatenate(rows, axis=0))


def residual_block(x_nchw, w1, b1, w2, b2):
    """x_nchw: (B, C, H, W) float32 (PyTorch layout). Returns (B, C, H, W)."""
    B, C, H, W = x_nchw.shape
    HW = H * W
    K = 9 * C + 1                                               # im2col rows (+ bias row)

    x = x_nchw.reshape(B, C, HW).astype(jnp.float32)            # free reshape (NCHW)
    w1p = _pack_weight(w1, b1)
    w2p = _pack_weight(w2, b2)
    mask = _make_mask(C, H, W)

    kernel = functools.partial(residual_block_kernel, H=H, W=W)

    out = pl.pallas_call(
        kernel,
        out_shape=jax.ShapeDtypeStruct((B, C, HW), jnp.float32),
        grid_spec=pltpu.PrefetchScalarGridSpec(
            num_scalar_prefetch=0,
            grid=(B,),                                          # one sample / step
            in_specs=[
                pl.BlockSpec((1, C, HW), lambda b: (b, 0, 0)),
                pl.BlockSpec((C, K), lambda b: (0, 0)),         # weights resident
                pl.BlockSpec((C, K), lambda b: (0, 0)),
                pl.BlockSpec((K, HW), lambda b: (0, 0)),        # mask resident
            ],
            out_specs=pl.BlockSpec((1, C, HW), lambda b: (b, 0, 0)),
        ),
        compiler_params=pltpu.CompilerParams(
            dimension_semantics=("parallel",)),                 # batch is independent
    )(x, w1p, w2p, mask)

    return out.reshape(B, C, H, W)


def ref_forward(x, w1, b1, w2, b2):
    """Pure-JAX reference mirroring the PyTorch module (NCHW, HWIO weights)."""
    def block(a, w, b):
        mean = jnp.mean(a, axis=(2, 3), keepdims=True)
        var = jnp.mean((a - mean) ** 2, axis=(2, 3), keepdims=True)
        a = (a - mean) / jnp.sqrt(var + EPS)
        a = jnp.maximum(a, 0.0)
        w_oihw = jnp.transpose(w, (3, 2, 0, 1))
        o = jax.lax.conv_general_dilated(
            a, w_oihw, window_strides=(1, 1), padding=((1, 1), (1, 1)),
            dimension_numbers=("NCHW", "OIHW", "NCHW"))
        return o + b.reshape(1, -1, 1, 1)

    out = block(x, w1, b1)
    out = block(out, w2, b2)
    return x + out


if __name__ == "__main__":
    key = jax.random.PRNGKey(0)
    kx, k1, k2, k3, k4 = jax.random.split(key, 5)

    B, C, H, W = 2, 4, 16, 16
    x = jax.random.normal(kx, (B, C, H, W), dtype=jnp.float32)
    # Deterministic synthetic parameters (Conv2d(in=C, out=C, 3, padding=1) x 2).
    w1 = 0.1 * jax.random.normal(k1, (3, 3, C, C), dtype=jnp.float32)
    b1 = 0.1 * jax.random.normal(k2, (C,), dtype=jnp.float32)
    w2 = 0.1 * jax.random.normal(k3, (3, 3, C, C), dtype=jnp.float32)
    b2 = 0.1 * jax.random.normal(k4, (C,), dtype=jnp.float32)

    out = residual_block(x, w1, b1, w2, b2)
    out = jax.block_until_ready(out)

    ref = ref_forward(x, w1, b1, w2, b2)
    assert out.shape == ref.shape == (B, C, H, W)
    max_err = float(jnp.max(jnp.abs(out - ref)))
    assert jnp.allclose(out, ref, atol=1e-4, rtol=1e-4), max_err
    print("KERNEL_OK")
</pallas_src>

<mosaic_0001>
module attributes {stable_mosaic.version = 11 : i64} {
  func.func @residual_block_kernel(%arg0: i32, %arg1: memref<1x4x256xf32, #tpu.memory_space<vmem>>, %arg2: memref<4x37xf32, #tpu.memory_space<vmem>>, %arg3: memref<4x37xf32, #tpu.memory_space<vmem>>, %arg4: memref<37x256xf32, #tpu.memory_space<vmem>>, %arg5: memref<1x4x256xf32, #tpu.memory_space<vmem>>) attributes {dimension_semantics = [#tpu.dimension_semantics<parallel>], iteration_bounds = array<i64: 2>, scalar_prefetch = 0 : i64, scratch_operands = 0 : i64, tpu.core_type = #tpu.core_type<tc>, window_params = [{transform_indices = @transform_0, window_bounds = array<i64: 1, 4, 256>}, {pipeline_mode = #tpu.pipeline_mode<synchronous>, transform_indices = @transform_1, window_bounds = array<i64: 4, 37>}, {pipeline_mode = #tpu.pipeline_mode<synchronous>, transform_indices = @transform_2, window_bounds = array<i64: 4, 37>}, {pipeline_mode = #tpu.pipeline_mode<synchronous>, transform_indices = @transform_3, window_bounds = array<i64: 37, 256>}, {transform_indices = @transform_4, window_bounds = array<i64: 1, 4, 256>}]} {
    %c0 = arith.constant 0 : index
    %c0_0 = arith.constant 0 : index
    %c0_1 = arith.constant 0 : index
    %0 = vector.load %arg1[%c0, %c0_0, %c0_1] : memref<1x4x256xf32, #tpu.memory_space<vmem>>, vector<1x4x256xf32>
    %1 = vector.shape_cast %0 : vector<1x4x256xf32> to vector<4x256xf32>
    %c0_2 = arith.constant 0 : index
    %c0_3 = arith.constant 0 : index
    %2 = vector.load %arg4[%c0_2, %c0_3] : memref<37x256xf32, #tpu.memory_space<vmem>>, vector<37x256xf32>
    %cst = arith.constant 1.000000e+00 : f32
    %3 = vector.broadcast %cst : f32 to vector<1x256xf32>
    %cst_4 = arith.constant dense<0.000000e+00> : vector<4xf32>
    %4 = vector.multi_reduction <add>, %1, %cst_4 [1] : vector<4x256xf32> to vector<4xf32>
    %5 = vector.shape_cast %4 : vector<4xf32> to vector<4x1xf32>
    %cst_5 = arith.constant 3.906250e-03 : f32
    %6 = vector.broadcast %cst_5 : f32 to vector<4x1xf32>
    %7 = arith.mulf %5, %6 : vector<4x1xf32>
    %8 = arith.mulf %1, %1 : vector<4x256xf32>
    %cst_6 = arith.constant dense<0.000000e+00> : vector<4xf32>
    %9 = vector.multi_reduction <add>, %8, %cst_6 [1] : vector<4x256xf32> to vector<4xf32>
    %10 = vector.shape_cast %9 : vector<4xf32> to vector<4x1xf32>
    %cst_7 = arith.constant 3.906250e-03 : f32
    %11 = vector.broadcast %cst_7 : f32 to vector<4x1xf32>
    %12 = arith.mulf %10, %11 : vector<4x1xf32>
    %13 = arith.mulf %7, %7 : vector<4x1xf32>
    %14 = arith.subf %12, %13 : vector<4x1xf32>
    %15 = vector.broadcast %7 : vector<4x1xf32> to vector<4x256xf32>
    %16 = arith.subf %1, %15 : vector<4x256xf32>
    %cst_8 = arith.constant 9.99999974E-6 : f32
    %17 = vector.broadcast %cst_8 : f32 to vector<4x1xf32>
    %18 = arith.addf %14, %17 : vector<4x1xf32>
    %19 = math.rsqrt %18 : vector<4x1xf32>
    %20 = vector.broadcast %19 : vector<4x1xf32> to vector<4x256xf32>
    %21 = arith.mulf %16, %20 : vector<4x256xf32>
    %cst_9 = arith.constant 0.000000e+00 : f32
    %22 = vector.broadcast %cst_9 : f32 to vector<4x256xf32>
    %23 = arith.maximumf %21, %22 : vector<4x256xf32>
    %c17_i32 = arith.constant 17 : i32
    %24 = tpu.dynamic_rotate %23 by %c17_i32 dim 1 : vector<4x256xf32>, i32 -> vector<4x256xf32>
    %c16_i32 = arith.constant 16 : i32
    %25 = tpu.dynamic_rotate %23 by %c16_i32 dim 1 : vector<4x256xf32>, i32 -> vector<4x256xf32>
    %c15_i32 = arith.constant 15 : i32
    %26 = tpu.dynamic_rotate %23 by %c15_i32 dim 1 : vector<4x256xf32>, i32 -> vector<4x256xf32>
    %c1_i32 = arith.constant 1 : i32
    %27 = tpu.dynamic_rotate %23 by %c1_i32 dim 1 : vector<4x256xf32>, i32 -> vector<4x256xf32>
    %c255_i32 = arith.constant 255 : i32
    %28 = tpu.dynamic_rotate %23 by %c255_i32 dim 1 : vector<4x256xf32>, i32 -> vector<4x256xf32>
    %c241_i32 = arith.constant 241 : i32
    %29 = tpu.dynamic_rotate %23 by %c241_i32 dim 1 : vector<4x256xf32>, i32 -> vector<4x256xf32>
    %c240_i32 = arith.constant 240 : i32
    %30 = tpu.dynamic_rotate %23 by %c240_i32 dim 1 : vector<4x256xf32>, i32 -> vector<4x256xf32>
    %c239_i32 = arith.constant 239 : i32
    %31 = tpu.dynamic_rotate %23 by %c239_i32 dim 1 : vector<4x256xf32>, i32 -> vector<4x256xf32>
    %32 = tpu.concatenate %24, %25, %26, %27, %23, %28, %29, %30, %31, %3 in 0 : vector<4x256xf32>, vector<4x256xf32>, vector<4x256xf32>, vector<4x256xf32>, vector<4x256xf32>, vector<4x256xf32>, vector<4x256xf32>, vector<4x256xf32>, vector<4x256xf32>, vector<1x256xf32> -> vector<37x256xf32>
    %33 = arith.mulf %32, %2 : vector<37x256xf32>
    %c0_10 = arith.constant 0 : index
    %c0_11 = arith.constant 0 : index
    %34 = vector.load %arg2[%c0_10, %c0_11] : memref<4x37xf32, #tpu.memory_space<vmem>>, vector<4x37xf32>
    %cst_12 = arith.constant dense<0.000000e+00> : vector<4x256xf32>
    %35 = tpu.matmul %34, %33, %cst_12 {dimension_numbers = #tpu.dot_dimension_numbers<[1], [0], [0], [1], [0, 0, 1, 1], [], []>} : vector<4x37xf32>, vector<37x256xf32>, vector<4x256xf32> -> vector<4x256xf32>
    %cst_13 = arith.constant dense<0.000000e+00> : vector<4xf32>
    %36 = vector.multi_reduction <add>, %35, %cst_13 [1] : vector<4x256xf32> to vector<4xf32>
    %37 = vector.shape_cast %36 : vector<4xf32> to vector<4x1xf32>
    %cst_14 = arith.constant 3.906250e-03 : f32
    %38 = vector.broadcast %cst_14 : f32 to vector<4x1xf32>
    %39 = arith.mulf %37, %38 : vector<4x1xf32>
    %40 = arith.mulf %35, %35 : vector<4x256xf32>
    %cst_15 = arith.constant dense<0.000000e+00> : vector<4xf32>
    %41 = vector.multi_reduction <add>, %40, %cst_15 [1] : vector<4x256xf32> to vector<4xf32>
    %42 = vector.shape_cast %41 : vector<4xf32> to vector<4x1xf32>
    %cst_16 = arith.constant 3.906250e-03 : f32
    %43 = vector.broadcast %cst_16 : f32 to vector<4x1xf32>
    %44 = arith.mulf %42, %43 : vector<4x1xf32>
    %45 = arith.mulf %39, %39 : vector<4x1xf32>
    %46 = arith.subf %44, %45 : vector<4x1xf32>
    %47 = vector.broadcast %39 : vector<4x1xf32> to vector<4x256xf32>
    %48 = arith.subf %35, %47 : vector<4x256xf32>
    %cst_17 = arith.constant 9.99999974E-6 : f32
    %49 = vector.broadcast %cst_17 : f32 to vector<4x1xf32>
    %50 = arith.addf %46, %49 : vector<4x1xf32>
    %51 = math.rsqrt %50 : vector<4x1xf32>
    %52 = vector.broadcast %51 : vector<4x1xf32> to vector<4x256xf32>
    %53 = arith.mulf %48, %52 : vector<4x256xf32>
    %cst_18 = arith.constant 0.000000e+00 : f32
    %54 = vector.broadcast %cst_18 : f32 to vector<4x256xf32>
    %55 = arith.maximumf %53, %54 : vector<4x256xf32>
    %c17_i32_19 = arith.constant 17 : i32
    %56 = tpu.dynamic_rotate %55 by %c17_i32_19 dim 1 : vector<4x256xf32>, i32 -> vector<4x256xf32>
    %c16_i32_20 = arith.constant 16 : i32
    %57 = tpu.dynamic_rotate %55 by %c16_i32_20 dim 1 : vector<4x256xf32>, i32 -> vector<4x256xf32>
    %c15_i32_21 = arith.constant 15 : i32
    %58 = tpu.dynamic_rotate %55 by %c15_i32_21 dim 1 : vector<4x256xf32>, i32 -> vector<4x256xf32>
    %c1_i32_22 = arith.constant 1 : i32
    %59 = tpu.dynamic_rotate %55 by %c1_i32_22 dim 1 : vector<4x256xf32>, i32 -> vector<4x256xf32>
    %c255_i32_23 = arith.constant 255 : i32
    %60 = tpu.dynamic_rotate %55 by %c255_i32_23 dim 1 : vector<4x256xf32>, i32 -> vector<4x256xf32>
    %c241_i32_24 = arith.constant 241 : i32
    %61 = tpu.dynamic_rotate %55 by %c241_i32_24 dim 1 : vector<4x256xf32>, i32 -> vector<4x256xf32>
    %c240_i32_25 = arith.constant 240 : i32
    %62 = tpu.dynamic_rotate %55 by %c240_i32_25 dim 1 : vector<4x256xf32>, i32 -> vector<4x256xf32>
    %c239_i32_26 = arith.constant 239 : i32
    %63 = tpu.dynamic_rotate %55 by %c239_i32_26 dim 1 : vector<4x256xf32>, i32 -> vector<4x256xf32>
    %64 = tpu.concatenate %56, %57, %58, %59, %55, %60, %61, %62, %63, %3 in 0 : vector<4x256xf32>, vector<4x256xf32>, vector<4x256xf32>, vector<4x256xf32>, vector<4x256xf32>, vector<4x256xf32>, vector<4x256xf32>, vector<4x256xf32>, vector<4x256xf32>, vector<1x256xf32> -> vector<37x256xf32>
    %65 = arith.mulf %64, %2 : vector<37x256xf32>
    %c0_27 = arith.constant 0 : index
    %c0_28 = arith.constant 0 : index
    %66 = vector.load %arg3[%c0_27, %c0_28] : memref<4x37xf32, #tpu.memory_space<vmem>>, vector<4x37xf32>
    %cst_29 = arith.constant dense<0.000000e+00> : vector<4x256xf32>
    %67 = tpu.matmul %66, %65, %cst_29 {dimension_numbers = #tpu.dot_dimension_numbers<[1], [0], [0], [1], [0, 0, 1, 1], [], []>} : vector<4x37xf32>, vector<37x256xf32>, vector<4x256xf32> -> vector<4x256xf32>
    %68 = arith.addf %1, %67 : vector<4x256xf32>
    %c0_30 = arith.constant 0 : index
    %c0_31 = arith.constant 0 : index
    %c0_32 = arith.constant 0 : index
    %69 = vector.load %arg5[%c0_30, %c0_31, %c0_32] : memref<1x4x256xf32, #tpu.memory_space<vmem>>, vector<1x4x256xf32>
    %70 = vector.shape_cast %69 : vector<1x4x256xf32> to vector<4x256xf32>
    %71 = vector.shape_cast %68 : vector<4x256xf32> to vector<1x4x256xf32>
    tpu.vector_store %arg5[%c0_30, %c0_31, %c0_32], %71 {strides = array<i32>} : memref<1x4x256xf32, #tpu.memory_space<vmem>>, vector<1x4x256xf32>,
    return
  }
  func.func @transform_0(%arg0: i32) -> (i32, i32, i32) {
    %c0_i32 = arith.constant 0 : i32
    %c0_i32_0 = arith.constant 0 : i32
    %c0_i32_1 = arith.constant 0 : i32
    return %arg0, %c0_i32, %c0_i32_0 : i32, i32, i32
  }
  func.func @transform_1(%arg0: i32) -> (i32, i32) {
    %c0_i32 = arith.constant 0 : i32
    %c0_i32_0 = arith.constant 0 : i32
    %c0_i32_1 = arith.constant 0 : i32
    return %c0_i32, %c0_i32_0 : i32, i32
  }
  func.func @transform_2(%arg0: i32) -> (i32, i32) {
    %c0_i32 = arith.constant 0 : i32
    %c0_i32_0 = arith.constant 0 : i32
    %c0_i32_1 = arith.constant 0 : i32
    return %c0_i32, %c0_i32_0 : i32, i32
  }
  func.func @transform_3(%arg0: i32) -> (i32, i32) {
    %c0_i32 = arith.constant 0 : i32
    %c0_i32_0 = arith.constant 0 : i32
    %c0_i32_1 = arith.constant 0 : i32
    return %c0_i32, %c0_i32_0 : i32, i32
  }
  func.func @transform_4(%arg0: i32) -> (i32, i32, i32) {
    %c0_i32 = arith.constant 0 : i32
    %c0_i32_0 = arith.constant 0 : i32
    %c0_i32_1 = arith.constant 0 : i32
    return %arg0, %c0_i32, %c0_i32_0 : i32, i32, i32
  }
}

</mosaic_0001>

<llo_original>
// kernel: tpu_custom_call.1
$region0: #{tpu_custom_call.1}
  #allocation0 [shape = 'u32[]', space=smem, size = 0x4, offset = 0x4, fixed_abs, tag = 'smem constant byte address 0x4 - core index']
  #allocation1 [shape = 'u32[144,128]{1,0:T(1,128)}', space=vmem, size = 0x12000, scoped, tag = 'internal scratch']
  %s0 = inlined_call_operand.hbm [shape: f32[2,4,256], index: 0, kind: input, shape index: {}]
  %s1 = inlined_call_operand.hbm [shape: f32[4,37], index: 1, kind: input, shape index: {}]
  %s2 = inlined_call_operand.vmem [shape: f32[4,37], index: 2, kind: input, shape index: {}]
  %s3 = inlined_call_operand.hbm [shape: f32[37,256], index: 3, kind: input, shape index: {}]
  %s4 = inlined_call_operand.hbm [shape: f32[2,4,256], index: 4, kind: output, shape index: {}]
  %s5 = sld [smem:[#allocation0]]
  $region61: #{tpu_custom_call.1} parent=0
    _
  %s7 = ssub.s32 1, %s5
  %s8 = scalar_select 0, %s7, %s5
  $region1: #{tpu_custom_call.1} parent=0
    #allocation2 [shape = 'u8[8192]{0}', space=vmem, size = 0x2000, scoped, tag = 'input window, operand 0']
    #allocation3 [shape = 's32[2]{0}', space=sflag, size = 0x8, scoped, tag = 'scoped memory for tpu_custom_call.1']
    #allocation4 [shape = 's32[2]{0}', space=sflag, size = 0x8, scoped, tag = 'scoped memory for tpu_custom_call.1']
    #allocation5 [shape = 'u8[2048]{0}', space=vmem, size = 0x800, scoped, tag = 'input window, operand 1, single buffered']
    #allocation6 [shape = 's32[1]{0}', space=sflag, size = 0x4, scoped, tag = 'scoped memory for tpu_custom_call.1']
    #allocation7 [shape = 'u8[40960]{0}', space=vmem, size = 0xa000, scoped, tag = 'input window, operand 3, single buffered']
    #allocation8 [shape = 'u8[8192]{0}', space=vmem, size = 0x2000, scoped, tag = 'output window, operand 0']
    %9 = vsyncpa [#allocation3], 0
    %s10 = scalar_lea.sflag [#allocation3], 1
    %11 = vsyncpa %s10, 0
    %12 = vsyncpa [#allocation6], 0
    %13 = vsyncpa [#allocation4], 0
    %s14 = scalar_lea.sflag [#allocation4], 1
    %15 = vsyncpa %s14, 0
    loop: start=0, step=1, limit=4
    $region2: #{tpu_custom_call.1} parent=1 // loop_pre_header
      _
    $region3: #{tpu_custom_call.1} parent=1 // loop_header
      %s17 = sphi 0, %s21
      %p18 = scmp.ge.s32.totalorder %s17, 4
      %s27 = sphi 0, %s29
      %s30 = sphi 0, %s27
      %s31 = sphi 0, %s30
      %s47 = sphi 0, %s31
      %s51 = sphi 0, %s51
      %s53 = sphi 0, %s51
      %s54 = sphi 0, %s53
      %s68 = sphi 0, %s54
      %s72 = sphi 0, %s72
      %s74 = sphi 0, %s72
      %s75 = sphi 0, %s74
      %s89 = sphi 0, %s75
      %s93 = sphi 0, %s93
      %s95 = sphi 0, %s93
      %s96 = sphi 0, %s95
      %s110 = sphi 0, %s96
      %s116 = sphi 0, %s118
      %s119 = sphi 0, %s116
      %s120 = sphi 0, %s119
      %s136 = sphi 0, %s120
    $region4: #{tpu_custom_call.1} parent=1 // loop_header_branch
      %20 = sbr.rel (%p18) target = $region8
    $region5: #{tpu_custom_call.1} parent=1 // loop_body
      %s22 = ssub.s32 %s17, 1
      %s23 = ssub.s32 %s17, 2
      %s24 = sadd.s32 %s17, 1
      %s25 = ssub.s32 %s17, %s24
      %p26 = scmp.eq.s32.totalorder %s25, 0
      %s28 = sadd.s32 %s27, 1
      %s29 = scalar_select %p26, %s27, %s28
      %p32 = pneg %p26
      %p33 = scmp.eq.s32.totalorder %s17, 1
      %p34 = por %p32, %p33
      %p35 = scmp.ne.s32.totalorder %s27, %s30
      %p36 = scmp.eq.s32.totalorder %s17, 0
      %p37 = por %p35, %p36
      %p38 = scmp.ne.s32.totalorder %s27, %s30
      %p39 = scmp.eq.s32.totalorder %s22, 1
      %p40 = por %p38, %p39
      %p41 = scmp.ne.s32.totalorder %s30, %s31
      %p42 = scmp.eq.s32.totalorder %s22, 0
      %p43 = por %p41, %p42
      %p44 = scmp.ne.s32.totalorder %s30, %s31
      %p45 = scmp.eq.s32.totalorder %s23, 1
      %p46 = por %p44, %p45
      %p48 = scmp.ne.s32.totalorder %s31, %s47
      %p49 = scmp.eq.s32.totalorder %s23, 0
      %p50 = por %p48, %p49
      %s52 = sadd.s32 %s51, 1
      %p55 = scmp.eq.s32.totalorder %s17, 1
      %p56 = scmp.ne.s32.totalorder %s51, %s53
      %p57 = scmp.eq.s32.totalorder %s17, 0
      %p58 = por %p56, %p57
      %p59 = scmp.ne.s32.totalorder %s51, %s53
      %p60 = scmp.eq.s32.totalorder %s22, 1
      %p61 = por %p59, %p60
      %p62 = scmp.ne.s32.totalorder %s53, %s54
      %p63 = scmp.eq.s32.totalorder %s22, 0
      %p64 = por %p62, %p63
      %p65 = scmp.ne.s32.totalorder %s53, %s54
      %p66 = scmp.eq.s32.totalorder %s23, 1
      %p67 = por %p65, %p66
      %p69 = scmp.ne.s32.totalorder %s54, %s68
      %p70 = scmp.eq.s32.totalorder %s23, 0
      %p71 = por %p69, %p70
      %s73 = sadd.s32 %s72, 1
      %p76 = scmp.eq.s32.totalorder %s17, 1
      %p77 = scmp.ne.s32.totalorder %s72, %s74
      %p78 = scmp.eq.s32.totalorder %s17, 0
      %p79 = por %p77, %p78
      %p80 = scmp.ne.s32.totalorder %s72, %s74
      %p81 = scmp.eq.s32.totalorder %s22, 1
      %p82 = por %p80, %p81
      %p83 = scmp.ne.s32.totalorder %s74, %s75
      %p84 = scmp.eq.s32.totalorder %s22, 0
      %p85 = por %p83, %p84
      %p86 = scmp.ne.s32.totalorder %s74, %s75
      %p87 = scmp.eq.s32.totalorder %s23, 1
      %p88 = por %p86, %p87
      %p90 = scmp.ne.s32.totalorder %s75, %s89
      %p91 = scmp.eq.s32.totalorder %s23, 0
      %p92 = por %p90, %p91
      %s94 = sadd.s32 %s93, 1
      %p97 = scmp.eq.s32.totalorder %s17, 1
      %p98 = scmp.ne.s32.totalorder %s93, %s95
      %p99 = scmp.eq.s32.totalorder %s17, 0
      %p100 = por %p98, %p99
      %p101 = scmp.ne.s32.totalorder %s93, %s95
      %p102 = scmp.eq.s32.totalorder %s22, 1
      %p103 = por %p101, %p102
      %p104 = scmp.ne.s32.totalorder %s95, %s96
      %p105 = scmp.eq.s32.totalorder %s22, 0
      %p106 = por %p104, %p105
      %p107 = scmp.ne.s32.totalorder %s95, %s96
      %p108 = scmp.eq.s32.totalorder %s23, 1
      %p109 = por %p107, %p108
      %p111 = scmp.ne.s32.totalorder %s96, %s110
      %p112 = scmp.eq.s32.totalorder %s23, 0
      %p113 = por %p111, %p112
      %s114 = ssub.s32 %s17, %s24
      %p115 = scmp.eq.s32.totalorder %s114, 0
      %s117 = sadd.s32 %s116, 1
      %s118 = scalar_select %p115, %s116, %s117
      %p121 = pneg %p115
      %p122 = scmp.eq.s32.totalorder %s17, 1
      %p123 = por %p121, %p122
      %p124 = scmp.ne.s32.totalorder %s116, %s119
      %p125 = scmp.eq.s32.totalorder %s17, 0
      %p126 = por %p124, %p125
      %p127 = scmp.ne.s32.totalorder %s116, %s119
      %p128 = scmp.eq.s32.totalorder %s22, 1
      %p129 = por %p127, %p128
      %p130 = scmp.ne.s32.totalorder %s119, %s120
      %p131 = scmp.eq.s32.totalorder %s22, 0
      %p132 = por %p130, %p131
      %p133 = scmp.ne.s32.totalorder %s119, %s120
      %p134 = scmp.eq.s32.totalorder %s23, 1
      %p135 = por %p133, %p134
      %p137 = scmp.ne.s32.totalorder %s120, %s136
      %p138 = scmp.eq.s32.totalorder %s23, 0
      %p139 = por %p137, %p138
      %p140 = scmp.le.s32.totalorder 1, %s17
      %p141 = scmp.lt.s32.totalorder %s17, 3
      %p142 = pnand %p140, %p141
      %p143 = pneg %p142
      // Predicated region
      $region9: #{tpu_custom_call.1} parent=5 // pred_check
        _
      $region10: #{tpu_custom_call.1} parent=5 // pred_check_branch
        %145 = sbr.rel (%p142) target = $region12
      $region11: #{tpu_custom_call.1} parent=5 // pred_region
        %s146 = ssub.s32 %s17, 1
        // Predicated region
        $region13: #{tpu_custom_call.1} parent=11 // pred_check
          %p147 = pneg %p64
        $region14: #{tpu_custom_call.1} parent=11 // pred_check_branch
          %149 = sbr.rel (%p147) target = $region16
        $region15: #{tpu_custom_call.1} parent=11 // pred_region
          %s151 = ssub.s32 64, 64
          %152 = vsyncadd [#allocation6], %s151
          %s154 = sshll.u32 [#allocation5], 4
          %s155 = int_to_ptr.vmem [resolvable:$true] %s154
          %157 = dma.hbm_to_vmem [thread:$0]  %s1, 64, %s155, [#allocation6]
        $region16: #{tpu_custom_call.1} parent=11 // pred_fallthru
          _
        // Predicated region
        $region17: #{tpu_custom_call.1} parent=11 // pred_check
          %p158 = pneg %p85
        $region18: #{tpu_custom_call.1} parent=11 // pred_check_branch
          %160 = sbr.rel (%p158) target = $region20
        $region19: #{tpu_custom_call.1} parent=11 // pred_region
          _
        $region20: #{tpu_custom_call.1} parent=11 // pred_fallthru
          _
        // Predicated region
        $region21: #{tpu_custom_call.1} parent=11 // pred_check
          %p161 = pneg %p106
        $region22: #{tpu_custom_call.1} parent=11 // pred_check_branch
          %163 = sbr.rel (%p161) target = $region24
        $region23: #{tpu_custom_call.1} parent=11 // pred_region
          %s165 = ssub.s32 1280, 1280
          %166 = vsyncadd [#allocation6], %s165
          %s167 = sshll.u32 [#allocation7], 4
          %s168 = int_to_ptr.vmem [resolvable:$true] %s167
          %173 = dma.hbm_to_vmem [thread:$0]  %s3, 1280, %s168, [#allocation6], 256, 256, 16
        $region24: #{tpu_custom_call.1} parent=11 // pred_fallthru
          _
      $region12: #{tpu_custom_call.1} parent=5 // pred_fallthru
        _
      %p174 = scmp.lt.s32.totalorder %s17, 2
      // Predicated region
      $region25: #{tpu_custom_call.1} parent=5 // pred_check
        %p175 = pneg %p174
      $region26: #{tpu_custom_call.1} parent=5 // pred_check_branch
        %177 = sbr.rel (%p175) target = $region28
      $region27: #{tpu_custom_call.1} parent=5 // pred_region
        // Predicated region
        $region29: #{tpu_custom_call.1} parent=27 // pred_check
          %p178 = pneg %p37
        $region30: #{tpu_custom_call.1} parent=27 // pred_check_branch
          %180 = sbr.rel (%p178) target = $region32
        $region31: #{tpu_custom_call.1} parent=27 // pred_region
          %s181 = sand.u32 %s27, 1
          %s182 = scalar_lea.sflag [#allocation3], %s181
          %s183 = sand.u32 %s27, 1
          %s184 = smul.addr %s183, 8
          %s185 = scalar_lea.vmem [#allocation2], %s184
          %s187 = ssub.s32 128, 128
          %188 = vsyncadd %s182, %s187
          %s189 = smul.addr %s17, 2
          %s190 = smul.addr %s189, 64
          %s191 = scalar_lea.hbm %s0, %s190
          %s193 = sshll.u32 %s185, 4
          %s194 = int_to_ptr.vmem [resolvable:$true] %s193
          %196 = dma.hbm_to_vmem [thread:$0]  %s191, 128, %s194, %s182
        $region32: #{tpu_custom_call.1} parent=27 // pred_fallthru
          _
      $region28: #{tpu_custom_call.1} parent=5 // pred_fallthru
        _
      %p197 = scmp.le.s32.totalorder 1, %s17
      %p198 = scmp.lt.s32.totalorder %s17, 3
      %p199 = pnand %p197, %p198
      %p200 = pneg %p199
      // Predicated region
      $region33: #{tpu_custom_call.1} parent=5 // pred_check
        _
      $region34: #{tpu_custom_call.1} parent=5 // pred_check_branch
        %202 = sbr.rel (%p199) target = $region36
      $region35: #{tpu_custom_call.1} parent=5 // pred_region
        %s203 = ssub.s32 %s17, 1
        %s204 = sand.u32 %s30, 1
        %s205 = scalar_lea.sflag [#allocation3], %s204
        %s206 = sand.u32 %s30, 1
        %s207 = smul.addr %s206, 8
        %s208 = scalar_lea.vmem [#allocation2], %s207
        // Predicated region
        $region37: #{tpu_custom_call.1} parent=35 // pred_check
          %p209 = pneg %p43
        $region38: #{tpu_custom_call.1} parent=35 // pred_check_branch
          %211 = sbr.rel (%p209) target = $region40
        $region39: #{tpu_custom_call.1} parent=35 // pred_region
          %212 = dma.done %s205, 128
        $region40: #{tpu_custom_call.1} parent=35 // pred_fallthru
          _
        // Predicated region
        $region41: #{tpu_custom_call.1} parent=35 // pred_check
          %p213 = pneg %p64
        $region42: #{tpu_custom_call.1} parent=35 // pred_check_branch
          %215 = sbr.rel (%p213) target = $region44
        $region43: #{tpu_custom_call.1} parent=35 // pred_region
          %216 = dma.done [#allocation6], 64
        $region44: #{tpu_custom_call.1} parent=35 // pred_fallthru
          _
        // Predicated region
        $region45: #{tpu_custom_call.1} parent=35 // pred_check
          %p217 = pneg %p106
        $region46: #{tpu_custom_call.1} parent=35 // pred_check_branch
          %219 = sbr.rel (%p217) target = $region48
        $region47: #{tpu_custom_call.1} parent=35 // pred_region
          %220 = dma.done [#allocation6], 1280
        $region48: #{tpu_custom_call.1} parent=35 // pred_fallthru
          _
        %s221 = sand.u32 %s30, 1
        %s222 = scalar_lea.sflag [#allocation3], %s221
        %s223 = sand.u32 %s30, 1
        %s224 = smul.addr %s223, 8
        %s225 = scalar_lea.vmem [#allocation2], %s224
        %p226 = pneg %p43
        %p227 = pneg %p40
        %p228 = pneg %p64
        %p229 = pneg %p61
        %p230 = pneg %p85
        %p231 = pneg %p82
        %p232 = pneg %p106
        %p233 = pneg %p103
        %p234 = pneg %p132
        %p235 = pneg %p129
        %s236 = sand.u32 %s119, 1
        %s237 = scalar_lea.sflag [#allocation4], %s236
        %s238 = sand.u32 %s119, 1
        %s239 = smul.addr %s238, 8
        %s240 = scalar_lea.vmem [#allocation8], %s239
        %v241 = vld [vmem:[%s208] sm:$0xff]
        %v242 = vld [vmem:[#allocation7] sm:$0xff]
        %v243 = vld [vmem:[#allocation7 + $0x8] sm:$0xff]
        %v244 = vld [vmem:[#allocation7 + $0x10] sm:$0xff]
        %v245 = vld [vmem:[#allocation7 + $0x18] sm:$0xff]
        %v246 = vld [vmem:[#allocation7 + $0x20] sm:$0xff]
        %v247 = vld [vmem:[#allocation7 + $0x28] sm:$0xff]
        %v248 = vld [vmem:[#allocation7 + $0x30] sm:$0xff]
        %v249 = vld [vmem:[#allocation7 + $0x38] sm:$0xff]
        %v250 = vld [vmem:[#allocation7 + $0x40] sm:$0x1f]
        %v251 = vld [vmem:[#allocation7 + $0x48] sm:$0x1f]
        %v253 = vcombine.high %v241, %v241
        %vm255 = vcmask 1043456
        %v256 = vsel %vm255, %v241, 0.0
        %v257 = vsel %vm255, %v253, 0.0
        %v258 = vadd.f32 %v256, %v257
        %259 = vadd.xlane.f32.xlu0 %v258
        %v260 = vpop.xlane.xlu0 %259
        %v261 = vmul.f32 %v260, 0.00390625
        %v262 = vmul.f32 %v241, %v241
        %v264 = vcombine.high %v262, %v262
        %v266 = vsel %vm255, %v262, 0.0
        %v267 = vsel %vm255, %v264, 0.0
        %v268 = vadd.f32 %v266, %v267
        %269 = vadd.xlane.f32.xlu0 %v268
        %v270 = vpop.xlane.xlu0 %269
        %v271 = vmul.f32 %v270, 0.00390625
        %v272 = vmul.f32 %v261, %v261
        %v273 = vsub.f32 %v271, %v272
        %v276 = vunpack.c.l.s4 839922192
        %v277 = vunpack.c.0.s8 %v276
        %v278 = vlaneseq
        %v279 = vshrl.u32 %v278, 7
        %v280 = vsub.s32 %v277, %v279
        %v281 = vrot.slane %v261, %v280
        %v283 = vsub.f32 %v241, %v281
        %v284 = vadd.f32 %v273, 1e-05
        %v285 = vrsqrt.pop %v284
        %v288 = vunpack.c.l.s4 839922192
        %v289 = vunpack.c.0.s8 %v288
        %v290 = vlaneseq
        %v291 = vshrl.u32 %v290, 7
        %v292 = vsub.s32 %v289, %v291
        %v293 = vrot.slane %v285, %v292
        %v295 = vmul.f32 %v283, %v293
        %v296 = vmax.f32 %v295, 0.0
        %v298 = vcombine.high %v296, %v296
        %300 = vrot.lane.b32.xlu0 %v296, 17
        %v301 = vpop.permute.xlu0 %300
        %302 = vrot.lane.b32.xlu0 %v298, 17
        %v303 = vpop.permute.xlu0 %302
        %v304 = vlaneseq
        %v305 = vand.u32 %v304, 127
        %vm306 = vcmp.lt.s32.totalorder %v305, 17
        %v307 = vsel %vm306, %v301, %v303
        %v308 = vsel %vm306, %v303, %v301
        %309 = vrot.lane.b32.xlu0 %v296, 16
        %v310 = vpop.permute.xlu0 %309
        %311 = vrot.lane.b32.xlu0 %v298, 16
        %v312 = vpop.permute.xlu0 %311
        %vm313 = vcmp.lt.s32.totalorder %v305, 16
        %v314 = vsel %vm313, %v310, %v312
        %v315 = vsel %vm313, %v312, %v310
        %316 = vrot.lane.b32.xlu0 %v296, 15
        %v317 = vpop.permute.xlu0 %316
        %318 = vrot.lane.b32.xlu0 %v298, 15
        %v319 = vpop.permute.xlu0 %318
        %vm320 = vcmp.lt.s32.totalorder %v305, 15
        %v321 = vsel %vm320, %v317, %v319
        %v322 = vsel %vm320, %v319, %v317
        %323 = vrot.lane.b32.xlu0 %v296, 1
        %v324 = vpop.permute.xlu0 %323
        %325 = vrot.lane.b32.xlu0 %v298, 1
        %v326 = vpop.permute.xlu0 %325
        %vm327 = vcmp.lt.s32.totalorder %v305, 1
        %v328 = vsel %vm327, %v324, %v326
        %v329 = vsel %vm327, %v326, %v324
        %330 = vrot.lane.b32.xlu0 %v296, 127
        %v331 = vpop.permute.xlu0 %330
        %332 = vrot.lane.b32.xlu0 %v298, 127
        %v333 = vpop.permute.xlu0 %332
        %vm334 = vcmp.lt.s32.totalorder %v305, 127
        %v335 = vsel %vm334, %v331, %v333
        %v336 = vsel %vm334, %v333, %v331
        %337 = vrot.lane.b32.xlu0 %v296, 113
        %v338 = vpop.permute.xlu0 %337
        %339 = vrot.lane.b32.xlu0 %v298, 113
        %v340 = vpop.permute.xlu0 %339
        %vm341 = vcmp.lt.s32.totalorder %v305, 113
        %v342 = vsel %vm341, %v338, %v340
        %v343 = vsel %vm341, %v340, %v338
        %344 = vrot.lane.b32.xlu0 %v296, 112
        %v345 = vpop.permute.xlu0 %344
        %346 = vrot.lane.b32.xlu0 %v298, 112
        %v347 = vpop.permute.xlu0 %346
        %vm348 = vcmp.lt.s32.totalorder %v305, 112
        %v349 = vsel %vm348, %v345, %v347
        %v350 = vsel %vm348, %v347, %v345
        %351 = vrot.lane.b32.xlu0 %v296, 111
        %v352 = vpop.permute.xlu0 %351
        %353 = vrot.lane.b32.xlu0 %v298, 111
        %v354 = vpop.permute.xlu0 %353
        %vm355 = vcmp.lt.s32.totalorder %v305, 111
        %v356 = vsel %vm355, %v352, %v354
        %v357 = vsel %vm355, %v354, %v352
        %v360 = vrot.slane %v315, 4
        %v361 = vrot.slane %v314, 4
        %v366 = vrot.slane %v329, 4
        %v367 = vrot.slane %v328, 4
        %v372 = vrot.slane %v335, 4
        %v373 = vrot.slane %v336, 4
        %v378 = vrot.slane %v349, 4
        %v379 = vrot.slane %v350, 4
        %v382 = vsel %vm255, %v308, %v360
        %v383 = vsel %vm255, %v307, %v361
        %v384 = vsel %vm255, %v322, %v366
        %v385 = vsel %vm255, %v321, %v367
        %v386 = vsel %vm255, %v296, %v372
        %v387 = vsel %vm255, %v298, %v373
        %v388 = vsel %vm255, %v342, %v378
        %v389 = vsel %vm255, %v343, %v379
        %v390 = vsel %vm255, %v356, 1.0
        %v391 = vsel %vm255, %v357, 1.0
        %v392 = vmul.f32 %v382, %v242
        %v393 = vmul.f32 %v383, %v243
        %v394 = vmul.f32 %v384, %v244
        %v395 = vmul.f32 %v385, %v245
        %v396 = vmul.f32 %v386, %v246
        %v397 = vmul.f32 %v387, %v247
        %v398 = vmul.f32 %v388, %v248
        %v399 = vmul.f32 %v389, %v249
        %v400 = vmul.f32 %v390, %v250
        %v401 = vmul.f32 %v391, %v251
        %v402 = vld [vmem:[#allocation5] sm:$0xf]
        %vm403 = vcmask 302080
        %v405 = vsel %vm403, %v402, 0
        %vm407 = vcmask 1044480
        %v409 = vsel %vm407, %v400, 0
        %v412 = vsel %vm407, %v401, 0
        %414 = vmatprep.subr.mxu0 %v393
        %415 = vmatpush1.msra.mxu0 %v392
        %416 = vmatprep.subr.mxu0 %v395
        %417 = vmatpush1.msra.mxu0 %v394
        %418 = vmatprep.subr.mxu0 %v397
        %419 = vmatpush1.msra.mxu0 %v396
        %420 = vmatprep.subr.mxu0 %v399
        %421 = vmatpush1.msra.mxu0 %v398
        %422 = vmatprep.subr.mxu0 %v412
        %423 = vmatpush1.msra.mxu0 %v409
        %424 = vmatprep.subr.mxu0 0.0
        %425 = vmatpush1.msra.mxu0 0.0
        %426 = vmatprep.subr.mxu0 0.0
        %427 = vmatpush1.msra.mxu0 0.0
        %428 = vmatprep.subr.mxu0 0.0
        %429 = vmatpush1.msra.mxu0 0.0
        %430 = vmatprep.subr.mxu0 0.0
        %431 = vmatpush1.msra.mxu0 0.0
        %432 = vmatprep.subr.mxu0 0.0
        %433 = vmatpush1.msra.mxu0 0.0
        %434 = vmatprep.subr.mxu0 0.0
        %435 = vmatpush1.msra.mxu0 0.0
        %436 = vmatprep.subr.mxu0 0.0
        %437 = vmatpush1.msra.mxu0 0.0
        %438 = vmatprep.subr.mxu0 0.0
        %439 = vmatpush1.msra.mxu0 0.0
        %440 = vmatprep.subr.mxu0 0.0
        %441 = vmatpush1.msra.mxu0 0.0
        %442 = vmatprep.subr.mxu0 0.0
        %443 = vmatpush1.msra.mxu0 0.0
        %444 = vmatprep.subr.mxu0 0.0
        %445 = vmatpush1.msra.mxu0 0.0
        %446 = vmatprep.subr.mxu0 0.0
        %447 = vmatpush1.msra.mxu0 0.0
        %448 = vmatprep.subr.mxu0 0.0
        %449 = vmatpush1.msra.mxu0 0.0
        %450 = vmatprep.subr.mxu0 0.0
        %451 = vmatpush1.msra.mxu0 0.0
        %452 = vmatprep.subr.mxu0 0.0
        %453 = vmatpush1.msra.mxu0 0.0
        %454 = vmatprep.subr.mxu0 0.0
        %455 = vmatpush1.msra.mxu0 0.0
        %456 = vmatprep.subr.mxu0 0.0
        %457 = vmatpush1.msra.mxu0 0.0
        %458 = vmatprep.subr.mxu0 0.0
        %459 = vmatpush1.msra.mxu0 0.0
        %460 = vmatprep.subr.mxu0 0.0
        %461 = vmatpush1.msra.mxu0 0.0
        %462 = vmatprep.subr.mxu0 0.0
        %463 = vmatpush1.msra.mxu0 0.0
        %464 = vmatprep.subr.mxu0 0.0
        %465 = vmatpush1.msra.mxu0 0.0
        %466 = vmatprep.subr.mxu0 0.0
        %467 = vmatpush1.msra.mxu0 0.0
        %468 = vmatprep.subr.mxu0 0.0
        %469 = vmatpush1.msra.mxu0 0.0
        %470 = vmatprep.subr.mxu0 0.0
        %471 = vmatpush1.msra.mxu0 0.0
        %472 = vmatprep.subr.mxu0 0.0
        %473 = vmatpush1.msra.mxu0 0.0
        %474 = vmatprep.subr.mxu0 0.0
        %475 = vmatpush1.msra.mxu0 0.0
        %476 = vmatprep.subr.mxu0 0.0
        %477 = vmatpush1.msra.mxu0 0.0
        %478 = vmatprep.mubr.f32.mxu0 0.0
        %479 = vmatmul.mubr.f32.gmra.mrb[0].mxu0 %v405
        %v480 = vpop.f32.mrb[0].mxu0
        %v481 = vadd.f32 0.0, %v480
        %v482 = vpop.f32.mrb[0].mxu0
        %v483 = vadd.f32 0.0, %v482
        %484 = vdwg.mxu0
        %v485 = vsel %vm255, %v481, 0.0
        %v486 = vsel %vm255, %v483, 0.0
        %v487 = vadd.f32 %v485, %v486
        %488 = vadd.xlane.f32.xlu0 %v487
        %v489 = vpop.xlane.xlu0 %488
        %v490 = vmul.f32 %v489, 0.00390625
        %v491 = vmul.f32 %v481, %v481
        %v492 = vmul.f32 %v483, %v483
        %v493 = vsel %vm255, %v491, 0.0
        %v494 = vsel %vm255, %v492, 0.0
        %v495 = vadd.f32 %v493, %v494
        %496 = vadd.xlane.f32.xlu0 %v495
        %v497 = vpop.xlane.xlu0 %496
        %v498 = vmul.f32 %v497, 0.00390625
        %v499 = vmul.f32 %v490, %v490
        %v500 = vsub.f32 %v498, %v499
        %v501 = vsub.f32 %v481, %v490
        %v502 = vsub.f32 %v483, %v490
        %v503 = vadd.f32 %v500, 1e-05
        %v504 = vrsqrt.pop %v503
        %v505 = vmul.f32 %v501, %v504
        %v506 = vmul.f32 %v502, %v504
        %v507 = vmax.f32 %v505, 0.0
        %v508 = vmax.f32 %v506, 0.0
        %509 = vrot.lane.b32.xlu0 %v507, 17
        %v510 = vpop.permute.xlu0 %509
        %511 = vrot.lane.b32.xlu0 %v508, 17
        %v512 = vpop.permute.xlu0 %511
        %v513 = vsel %vm306, %v510, %v512
        %v514 = vsel %vm306, %v512, %v510
        %515 = vrot.lane.b32.xlu0 %v507, 16
        %v516 = vpop.permute.xlu0 %515
        %517 = vrot.lane.b32.xlu0 %v508, 16
        %v518 = vpop.permute.xlu0 %517
        %v519 = vsel %vm313, %v516, %v518
        %v520 = vsel %vm313, %v518, %v516
        %521 = vrot.lane.b32.xlu0 %v507, 15
        %v522 = vpop.permute.xlu0 %521
        %523 = vrot.lane.b32.xlu0 %v508, 15
        %v524 = vpop.permute.xlu0 %523
        %v525 = vsel %vm320, %v522, %v524
        %v526 = vsel %vm320, %v524, %v522
        %527 = vrot.lane.b32.xlu0 %v507, 1
        %v528 = vpop.permute.xlu0 %527
        %529 = vrot.lane.b32.xlu0 %v508, 1
        %v530 = vpop.permute.xlu0 %529
        %v531 = vsel %vm327, %v528, %v530
        %v532 = vsel %vm327, %v530, %v528
        %533 = vrot.lane.b32.xlu0 %v507, 127
        %v534 = vpop.permute.xlu0 %533
        %535 = vrot.lane.b32.xlu0 %v508, 127
        %v536 = vpop.permute.xlu0 %535
        %v537 = vsel %vm334, %v534, %v536
        %v538 = vsel %vm334, %v536, %v534
        %539 = vrot.lane.b32.xlu0 %v507, 113
        %v540 = vpop.permute.xlu0 %539
        %541 = vrot.lane.b32.xlu0 %v508, 113
        %v542 = vpop.permute.xlu0 %541
        %v543 = vsel %vm341, %v540, %v542
        %v544 = vsel %vm341, %v542, %v540
        %545 = vrot.lane.b32.xlu0 %v507, 112
        %v546 = vpop.permute.xlu0 %545
        %547 = vrot.lane.b32.xlu0 %v508, 112
        %v548 = vpop.permute.xlu0 %547
        %v549 = vsel %vm348, %v546, %v548
        %v550 = vsel %vm348, %v548, %v546
        %551 = vrot.lane.b32.xlu0 %v507, 111
        %v552 = vpop.permute.xlu0 %551
        %553 = vrot.lane.b32.xlu0 %v508, 111
        %v554 = vpop.permute.xlu0 %553
        %v555 = vsel %vm355, %v552, %v554
        %v556 = vsel %vm355, %v554, %v552
        %v559 = vrot.slane %v520, 4
        %v560 = vrot.slane %v519, 4
        %v565 = vrot.slane %v532, 4
        %v566 = vrot.slane %v531, 4
        %v571 = vrot.slane %v537, 4
        %v572 = vrot.slane %v538, 4
        %v577 = vrot.slane %v549, 4
        %v578 = vrot.slane %v550, 4
        %v581 = vsel %vm255, %v514, %v559
        %v582 = vsel %vm255, %v513, %v560
        %v583 = vsel %vm255, %v526, %v565
        %v584 = vsel %vm255, %v525, %v566
        %v585 = vsel %vm255, %v507, %v571
        %v586 = vsel %vm255, %v508, %v572
        %v587 = vsel %vm255, %v543, %v577
        %v588 = vsel %vm255, %v544, %v578
        %v589 = vsel %vm255, %v555, 1.0
        %v590 = vsel %vm255, %v556, 1.0
        %v591 = vmul.f32 %v581, %v242
        %v592 = vmul.f32 %v582, %v243
        %v593 = vmul.f32 %v583, %v244
        %v594 = vmul.f32 %v584, %v245
        %v595 = vmul.f32 %v585, %v246
        %v596 = vmul.f32 %v586, %v247
        %v597 = vmul.f32 %v587, %v248
        %v598 = vmul.f32 %v588, %v249
        %v599 = vmul.f32 %v589, %v250
        %v600 = vmul.f32 %v590, %v251
        %v601 = vld [vmem:[%s2] sm:$0xf]
        %v603 = vsel %vm403, %v601, 0
        %v606 = vsel %vm407, %v599, 0
        %v609 = vsel %vm407, %v600, 0
        %611 = vmatprep.subr.mxu0 %v592
        %612 = vmatpush1.msra.mxu0 %v591
        %613 = vmatprep.subr.mxu0 %v594
        %614 = vmatpush1.msra.mxu0 %v593
        %615 = vmatprep.subr.mxu0 %v596
        %616 = vmatpush1.msra.mxu0 %v595
        %617 = vmatprep.subr.mxu0 %v598
        %618 = vmatpush1.msra.mxu0 %v597
        %619 = vmatprep.subr.mxu0 %v609
        %620 = vmatpush1.msra.mxu0 %v606
        %621 = vmatprep.subr.mxu0 0.0
        %622 = vmatpush1.msra.mxu0 0.0
        %623 = vmatprep.subr.mxu0 0.0
        %624 = vmatpush1.msra.mxu0 0.0
        %625 = vmatprep.subr.mxu0 0.0
        %626 = vmatpush1.msra.mxu0 0.0
        %627 = vmatprep.subr.mxu0 0.0
        %628 = vmatpush1.msra.mxu0 0.0
        %629 = vmatprep.subr.mxu0 0.0
        %630 = vmatpush1.msra.mxu0 0.0
        %631 = vmatprep.subr.mxu0 0.0
        %632 = vmatpush1.msra.mxu0 0.0
        %633 = vmatprep.subr.mxu0 0.0
        %634 = vmatpush1.msra.mxu0 0.0
        %635 = vmatprep.subr.mxu0 0.0
        %636 = vmatpush1.msra.mxu0 0.0
        %637 = vmatprep.subr.mxu0 0.0
        %638 = vmatpush1.msra.mxu0 0.0
        %639 = vmatprep.subr.mxu0 0.0
        %640 = vmatpush1.msra.mxu0 0.0
        %641 = vmatprep.subr.mxu0 0.0
        %642 = vmatpush1.msra.mxu0 0.0
        %643 = vmatprep.subr.mxu0 0.0
        %644 = vmatpush1.msra.mxu0 0.0
        %645 = vmatprep.subr.mxu0 0.0
        %646 = vmatpush1.msra.mxu0 0.0
        %647 = vmatprep.subr.mxu0 0.0
        %648 = vmatpush1.msra.mxu0 0.0
        %649 = vmatprep.subr.mxu0 0.0
        %650 = vmatpush1.msra.mxu0 0.0
        %651 = vmatprep.subr.mxu0 0.0
        %652 = vmatpush1.msra.mxu0 0.0
        %653 = vmatprep.subr.mxu0 0.0
        %654 = vmatpush1.msra.mxu0 0.0
        %655 = vmatprep.subr.mxu0 0.0
        %656 = vmatpush1.msra.mxu0 0.0
        %657 = vmatprep.subr.mxu0 0.0
        %658 = vmatpush1.msra.mxu0 0.0
        %659 = vmatprep.subr.mxu0 0.0
        %660 = vmatpush1.msra.mxu0 0.0
        %661 = vmatprep.subr.mxu0 0.0
        %662 = vmatpush1.msra.mxu0 0.0
        %663 = vmatprep.subr.mxu0 0.0
        %664 = vmatpush1.msra.mxu0 0.0
        %665 = vmatprep.subr.mxu0 0.0
        %666 = vmatpush1.msra.mxu0 0.0
        %667 = vmatprep.subr.mxu0 0.0
        %668 = vmatpush1.msra.mxu0 0.0
        %669 = vmatprep.subr.mxu0 0.0
        %670 = vmatpush1.msra.mxu0 0.0
        %671 = vmatprep.subr.mxu0 0.0
        %672 = vmatpush1.msra.mxu0 0.0
        %673 = vmatprep.subr.mxu0 0.0
        %674 = vmatpush1.msra.mxu0 0.0
        %675 = vmatprep.mubr.f32.mxu0 0.0
        %676 = vmatmul.mubr.f32.gmra.mrb[0].mxu0 %v603
        %v677 = vpop.f32.mrb[0].mxu0
        %v678 = vadd.f32 0.0, %v677
        %v679 = vpop.f32.mrb[0].mxu0
        %v680 = vadd.f32 0.0, %v679
        %681 = vdwg.mxu0
        %v684 = vcombine.low %v678, %v680
        %v686 = vadd.f32 %v241, %v684
        %687 = vst [vmem:[%s240] sm:$0xff] %v686
        %s688 = sand.u32 %s119, 1
        %s689 = scalar_lea.sflag [#allocation4], %s688
        %s690 = sand.u32 %s119, 1
        %s691 = smul.addr %s690, 8
        %s692 = scalar_lea.vmem [#allocation8], %s691
        // Predicated region
        $region49: #{tpu_custom_call.1} parent=35 // pred_check
          %p693 = pneg %p129
        $region50: #{tpu_custom_call.1} parent=35 // pred_check_branch
          %695 = sbr.rel (%p693) target = $region52
        $region51: #{tpu_custom_call.1} parent=35 // pred_region
          %s697 = ssub.s32 128, 128
          %698 = vsyncadd %s689, %s697
          %s699 = smul.addr %s22, 2
          %s700 = smul.addr %s699, 64
          %s701 = scalar_lea.hbm %s4, %s700
          %s703 = sshll.u32 %s692, 4
          %s704 = int_to_ptr.vmem [resolvable:$true] %s703
          %706 = dma.vmem_to_hbm [thread:$0]  %s704, 128, %s701, %s689
        $region52: #{tpu_custom_call.1} parent=35 // pred_fallthru
          _
      $region36: #{tpu_custom_call.1} parent=5 // pred_fallthru
        _
      %p707 = scmp.le.s32.totalorder 2, %s17
      // Predicated region
      $region53: #{tpu_custom_call.1} parent=5 // pred_check
        %p708 = pneg %p707
      $region54: #{tpu_custom_call.1} parent=5 // pred_check_branch
        %710 = sbr.rel (%p708) target = $region56
      $region55: #{tpu_custom_call.1} parent=5 // pred_region
        %s711 = ssub.s32 %s17, 2
        // Predicated region
        $region57: #{tpu_custom_call.1} parent=55 // pred_check
          %p712 = pneg %p135
        $region58: #{tpu_custom_call.1} parent=55 // pred_check_branch
          %714 = sbr.rel (%p712) target = $region60
        $region59: #{tpu_custom_call.1} parent=55 // pred_region
          %s715 = sand.u32 %s120, 1
          %s716 = scalar_lea.sflag [#allocation4], %s715
          %s717 = sand.u32 %s120, 1
          %s718 = smul.addr %s717, 8
          %s719 = scalar_lea.vmem [#allocation8], %s718
          %720 = dma.done %s716, 128
        $region60: #{tpu_custom_call.1} parent=55 // pred_fallthru
          _
      $region56: #{tpu_custom_call.1} parent=5 // pred_fallthru
        _
    $region6: #{tpu_custom_call.1} parent=1 // loop_footer
      %s21 = sadd.s32 1, %s17
    $region7: #{tpu_custom_call.1} parent=1 // loop_footer_branch
      %16 = sbr.rel target = $region3
    $region8: #{tpu_custom_call.1} parent=1 // loop_exit
      _
    %721 = vsyncpa [#allocation3], 1
    %s722 = scalar_lea.sflag [#allocation3], 1
    %723 = vsyncpa %s722, 1
    %724 = vsyncpa [#allocation6], 1
    %725 = vsyncpa [#allocation4], 1
    %s726 = scalar_lea.sflag [#allocation4], 1
    %727 = vsyncpa %s726, 1

</llo_original>
